<compile_context>
chip_gen: v7x
topology: tpu7x:2x2x1
jax: 0.10.0
libtpu: 0.0.40
codegen_flags: <defaults>
</compile_context>

<pallas_src>
import jax
import jax.numpy as jnp
from jax.experimental import pallas as pl
from jax.experimental.pallas import tpu as pltpu


# ----------------------------- hardware probing -------------------------------

def _tpu_info():
    """(vmem_capacity_bytes, tensorcores_per_chip) with safe fallbacks."""
    vmem = 128 << 20          # v5e / v6e physical VMEM
    cores = 1
    try:
        info = pltpu.get_tpu_info()
        vmem = int(getattr(info, "vmem_capacity_bytes", vmem))
        for name in ("num_cores", "core_count", "tensorcores_per_chip",
                     "num_tensorcores"):
            v = getattr(info, name, None)
            if v:
                cores = int(v)
                break
    except Exception:
        pass
    # v7x exposes 64 MiB VMEM per TensorCore and has 2 TCs per chip.
    if cores <= 1 and vmem <= (64 << 20):
        cores = 2
    return vmem, max(1, cores)


def _pad(n, m):
    return ((n + m - 1) // m) * m


def _pick_bt(B, per_batch_vmem_bytes, vmem_cap, cores):
    """Batch rows per grid step.

    ~3 MiB x-tiles on 64-MiB-VMEM parts (v7x), ~6 MiB on 128-MiB parts
    (v5e/v6e).  Force >=2 grid steps only when two TensorCores exist.
    """
    target = (3 << 20) if vmem_cap <= (64 << 20) else (6 << 20)
    bt = max(1, min(B, target // max(per_batch_vmem_bytes, 1)))
    if cores >= 2 and B > 1:
        bt = min(bt, (B + 1) // 2)
    while B % bt:             # keep blocks exact (no ragged last block)
        bt -= 1
    return bt


def _vmem_limit(need_bytes, vmem_cap):
    cap = (vmem_cap * 3) // 4            # ~25% headroom (48 MiB on v7x)
    return int(min(max(need_bytes + (8 << 20), 32 << 20), cap))


# ------------------------------ shared head math ------------------------------

def _head_from_pooled(pooled, w1t, b1, w2t, b2, wfct, bfc):
    """SE gate + avg-pool fusion + fc + L2-normalize on pooled (M, C) features."""
    h = jnp.maximum(
        jnp.dot(pooled, w1t, preferred_element_type=jnp.float32) + b1, 0.0)
    gate = jax.nn.sigmoid(
        jnp.dot(h, w2t, preferred_element_type=jnp.float32) + b2)
    feat = pooled * gate                     # avg_pool(x*gate) == avg_pool(x)*gate
    emb = jnp.dot(feat, wfct, preferred_element_type=jnp.float32) + bfc
    norm = jnp.sqrt(jnp.sum(emb * emb, axis=-1, keepdims=True))
    # F.normalize eps semantics; exact reciprocal on the EUP (no VPU divide).
    return emb * pl.reciprocal(jnp.maximum(norm, 1e-12))


# --------------------------- SE attention kernel ------------------------------

def se_attention_kernel(x_ref, w1t_ref, b1_ref, w2t_ref, b2_ref, o_ref):
    # x_ref block: (Bt, C, HW) -- native NCHW, no host transpose.
    inv_hw = 1.0 / x_ref.shape[2]
    x = x_ref[...]
    # squeeze: spatial mean = cross-lane (XLU) reduction, f32 accumulation
    pooled = jnp.sum(x.astype(jnp.float32), axis=2) * inv_hw            # (Bt, C)
    h = jnp.maximum(
        jnp.dot(pooled, w1t_ref[...], preferred_element_type=jnp.float32)
        + b1_ref[...], 0.0)                                             # (Bt, Cr)
    gate = jax.nn.sigmoid(
        jnp.dot(h, w2t_ref[...], preferred_element_type=jnp.float32)
        + b2_ref[...])                                                  # (Bt, C)
    # excitation: gate constant over spatial -> broadcast across lanes.
    # Multiply in f32 to stay numerically consistent with the fused head.
    o_ref[...] = (x.astype(jnp.float32) * gate[:, :, None]).astype(o_ref.dtype)


def se_attention(x_nchw, w1, b1, w2, b2):
    """AttentionModule.forward.  x_nchw: (B,C,H,W); w1: (Cr,C); w2: (C,Cr)."""
    B, C, H, W = x_nchw.shape
    Cr = w1.shape[0]
    HW = H * W
    dtype = x_nchw.dtype
    itemsize = jnp.dtype(dtype).itemsize

    x = x_nchw.reshape(B, C, HW)               # free reshape, NCHW preserved
    w1t = w1.T                                 # (C, Cr)
    w2t = w2.T                                 # (Cr, C)
    b1_2d = b1.reshape(1, Cr).astype(jnp.float32)
    b2_2d = b2.reshape(1, C).astype(jnp.float32)

    vmem_cap, cores = _tpu_info()
    per_batch_vmem = _pad(C, 8) * _pad(HW, 128) * itemsize     # lane-padded VMEM rows
    Bt = _pick_bt(B, 2 * per_batch_vmem, vmem_cap, cores)      # x read + x written
    grid = (B // Bt,)

    weight_vmem = 4 * (_pad(C, 8) * _pad(Cr, 128) + _pad(Cr, 8) * _pad(C, 128)
                       + 2 * _pad(C, 128) + 2 * _pad(Cr, 128))
    need = 2 * (2 * Bt * per_batch_vmem) + 2 * weight_vmem     # dbl-buffered io + weights

    cost = pl.CostEstimate(
        flops=int(4 * B * C * Cr + 3 * B * HW * C),
        transcendentals=int(B * C),
        bytes_accessed=int(2 * B * HW * C * itemsize + (2 * C * Cr + C + Cr) * 4),
    )

    out = pl.pallas_call(
        se_attention_kernel,
        out_shape=jax.ShapeDtypeStruct((B, C, HW), dtype),
        grid_spec=pltpu.PrefetchScalarGridSpec(
            num_scalar_prefetch=0,
            grid=grid,
            in_specs=[
                pl.BlockSpec((Bt, C, HW), lambda b: (b, 0, 0)),
                pl.BlockSpec((C, Cr), lambda b: (0, 0)),
                pl.BlockSpec((1, Cr), lambda b: (0, 0)),
                pl.BlockSpec((Cr, C), lambda b: (0, 0)),
                pl.BlockSpec((1, C), lambda b: (0, 0)),
            ],
            out_specs=pl.BlockSpec((Bt, C, HW), lambda b: (b, 0, 0)),
        ),
        compiler_params=pltpu.CompilerParams(
            dimension_semantics=("parallel",),
            vmem_limit_bytes=_vmem_limit(need, vmem_cap),
        ),
        cost_estimate=cost,
    )(x, w1t, b1_2d, w2t, b2_2d)
    return out.reshape(B, C, H, W)


# ---------------- fused attention + pooling + fc + L2-normalize ---------------

def se_head_kernel(x_ref, w1t_ref, b1_ref, w2t_ref, b2_ref, wfct_ref, bfc_ref,
                   o_ref):
    # x_ref block: (Bt, C, HW) NCHW; o_ref block: (Bt, 1, E)
    inv_hw = 1.0 / x_ref.shape[2]
    pooled = jnp.sum(x_ref[...].astype(jnp.float32), axis=2) * inv_hw   # (Bt, C)
    emb = _head_from_pooled(pooled, w1t_ref[...], b1_ref[...],
                            w2t_ref[...], b2_ref[...],
                            wfct_ref[...], bfc_ref[...])
    o_ref[...] = emb[:, None, :].astype(o_ref.dtype)


def se_head_pair_kernel(x1_ref, x2_ref, w1t_ref, b1_ref, w2t_ref, b2_ref,
                        wfct_ref, bfc_ref, o1_ref, o2_ref):
    # Both palm sides per grid step: weights resident once, matmul M = 2*Bt.
    Bt = x1_ref.shape[0]
    inv_hw = 1.0 / x1_ref.shape[2]
    pooled = jnp.concatenate(
        [jnp.sum(x1_ref[...].astype(jnp.float32), axis=2),
         jnp.sum(x2_ref[...].astype(jnp.float32), axis=2)],
        axis=0) * inv_hw                                                # (2*Bt, C)
    emb = _head_from_pooled(pooled, w1t_ref[...], b1_ref[...],
                            w2t_ref[...], b2_ref[...],
                            wfct_ref[...], bfc_ref[...])
    o1_ref[...] = emb[:Bt][:, None, :].astype(o1_ref.dtype)
    o2_ref[...] = emb[Bt:][:, None, :].astype(o2_ref.dtype)


def _head_call(feats, w1, b1, w2, b2, wfc, bfc):
    """Run the fused SE head over one or two feature tensors in a single call."""
    n_sides = len(feats)
    B, C, H, W = feats[0].shape
    Cr = w1.shape[0]
    E = wfc.shape[0]
    HW = H * W
    itemsize = jnp.dtype(feats[0].dtype).itemsize

    xs = [f.reshape(B, C, HW) for f in feats]   # free reshape, no transpose
    w1t = w1.T                                  # (C, Cr)
    w2t = w2.T                                  # (Cr, C)
    wfct = wfc.T                                # (C, E)
    b1_2d = b1.reshape(1, Cr).astype(jnp.float32)
    b2_2d = b2.reshape(1, C).astype(jnp.float32)
    bfc_2d = bfc.reshape(1, E).astype(jnp.float32)

    vmem_cap, cores = _tpu_info()
    per_batch_vmem = _pad(C, 8) * _pad(HW, 128) * itemsize
    Bt = _pick_bt(B, n_sides * per_batch_vmem, vmem_cap, cores)
    grid = (B // Bt,)

    weight_vmem = 4 * (_pad(C, 8) * _pad(Cr, 128) + _pad(Cr, 8) * _pad(C, 128)
                       + _pad(C, 8) * _pad(E, 128)
                       + 2 * _pad(Cr, 128) + 2 * _pad(C, 128) + 2 * _pad(E, 128))
    need = 2 * n_sides * Bt * per_batch_vmem + 2 * weight_vmem

    cost = pl.CostEstimate(
        flops=int(n_sides * (4 * B * C * Cr + 2 * B * C * E + 2 * B * HW * C)),
        transcendentals=int(n_sides * B * (C + E)),
        bytes_accessed=int(n_sides * B * (HW * C * itemsize + E * 4)
                           + (2 * C * Cr + C * E + C + Cr + E) * 4),
    )

    x_spec = pl.BlockSpec((Bt, C, HW), lambda b: (b, 0, 0))
    w_specs = [
        pl.BlockSpec((C, Cr), lambda b: (0, 0)),
        pl.BlockSpec((1, Cr), lambda b: (0, 0)),
        pl.BlockSpec((Cr, C), lambda b: (0, 0)),
        pl.BlockSpec((1, C), lambda b: (0, 0)),
        pl.BlockSpec((C, E), lambda b: (0, 0)),
        pl.BlockSpec((1, E), lambda b: (0, 0)),
    ]
    o_spec = pl.BlockSpec((Bt, 1, E), lambda b: (b, 0, 0))
    o_shape = jax.ShapeDtypeStruct((B, 1, E), jnp.float32)

    kernel = se_head_kernel if n_sides == 1 else se_head_pair_kernel
    out = pl.pallas_call(
        kernel,
        out_shape=o_shape if n_sides == 1 else (o_shape, o_shape),
        grid_spec=pltpu.PrefetchScalarGridSpec(
            num_scalar_prefetch=0,
            grid=grid,
            in_specs=[x_spec] * n_sides + w_specs,
            out_specs=o_spec if n_sides == 1 else [o_spec, o_spec],
        ),
        compiler_params=pltpu.CompilerParams(
            dimension_semantics=("parallel",),
            vmem_limit_bytes=_vmem_limit(need, vmem_cap),
        ),
        cost_estimate=cost,
    )(*xs, w1t, b1_2d, w2t, b2_2d, wfct, bfc_2d)

    if n_sides == 1:
        return (out.reshape(B, E),)
    return tuple(o.reshape(B, E) for o in out)


def forward_one_side(feat_nchw, w1, b1, w2, b2, wfc, bfc):
    """PalmprintResNet.forward_one_side minus the resnet50 backbone."""
    return _head_call((feat_nchw,), w1, b1, w2, b2, wfc, bfc)[0]


def palmprint_forward(feat1, feat2, w1, b1, w2, b2, wfc, bfc):
    """PalmprintResNet.forward on backbone features (both sides, ONE pallas_call)."""
    return _head_call((feat1, feat2), w1, b1, w2, b2, wfc, bfc)


# ------------------------------ references ------------------------------------

def se_attention_ref(x, w1, b1, w2, b2):
    pooled = jnp.mean(x, axis=(2, 3))                         # (B, C)
    h = jnp.maximum(pooled @ w1.T + b1, 0.0)                  # (B, Cr)
    s = jax.nn.sigmoid(h @ w2.T + b2)                         # (B, C)
    return x * s[:, :, None, None]


def forward_one_side_ref(x, w1, b1, w2, b2, wfc, bfc):
    att = se_attention_ref(x, w1, b1, w2, b2)
    pooled = jnp.mean(att, axis=(2, 3))                       # (B, C)
    emb = pooled @ wfc.T + bfc                                # (B, E)
    norm = jnp.sqrt(jnp.sum(emb * emb, axis=1, keepdims=True))
    return emb / jnp.maximum(norm, 1e-12)


# --------------------------------- main ---------------------------------------

if __name__ == "__main__":
    # Small shapes consistent with the module: SE block on a late ResNet stage
    # (channels multiple of 128), reduction=16, embedding=128.
    B, C, H, W = 2, 256, 8, 8
    reduction = 16
    Cr = C // reduction
    E = 128

    key = jax.random.PRNGKey(0)
    kx1, kx2, k1, k2, k3, k4, k5, k6 = jax.random.split(key, 8)
    feat1 = jax.random.normal(kx1, (B, C, H, W), dtype=jnp.float32)
    feat2 = jax.random.normal(kx2, (B, C, H, W), dtype=jnp.float32)
    w1 = 0.1 * jax.random.normal(k1, (Cr, C), dtype=jnp.float32)
    b1 = 0.1 * jax.random.normal(k2, (Cr,), dtype=jnp.float32)
    w2 = 0.1 * jax.random.normal(k3, (C, Cr), dtype=jnp.float32)
    b2 = 0.1 * jax.random.normal(k4, (C,), dtype=jnp.float32)
    wfc = 0.1 * jax.random.normal(k5, (E, C), dtype=jnp.float32)
    bfc = 0.1 * jax.random.normal(k6, (E,), dtype=jnp.float32)

    # 1) AttentionModule.forward (standalone SE rescale, NCHW in/out)
    att = jax.block_until_ready(se_attention(feat1, w1, b1, w2, b2))
    att_ref = se_attention_ref(feat1, w1, b1, w2, b2)
    assert att.shape == (B, C, H, W)
    assert jnp.allclose(att, att_ref, atol=1e-4, rtol=1e-4), "attention mismatch"

    # 2) single-side head (attention -> pool -> fc -> L2 normalize)
    one = jax.block_until_ready(forward_one_side(feat1, w1, b1, w2, b2, wfc, bfc))
    ref1 = forward_one_side_ref(feat1, w1, b1, w2, b2, wfc, bfc)
    assert one.shape == (B, E)
    assert jnp.allclose(one, ref1, atol=1e-4, rtol=1e-4), "single-side mismatch"

    # 3) PalmprintResNet.forward on backbone features (both sides, one call)
    out1, out2 = jax.block_until_ready(
        palmprint_forward(feat1, feat2, w1, b1, w2, b2, wfc, bfc))
    ref2 = forward_one_side_ref(feat2, w1, b1, w2, b2, wfc, bfc)
    assert out1.shape == (B, E) and out2.shape == (B, E)
    assert jnp.allclose(out1, ref1, atol=1e-4, rtol=1e-4), "side-1 embedding mismatch"
    assert jnp.allclose(out2, ref2, atol=1e-4, rtol=1e-4), "side-2 embedding mismatch"

    print("KERNEL_OK")
</pallas_src>

<mosaic_0001>
module attributes {stable_mosaic.version = 11 : i64} {
  func.func @se_attention_kernel(%arg0: i32, %arg1: memref<2x256x64xf32, #tpu.memory_space<vmem>>, %arg2: memref<256x16xf32, #tpu.memory_space<vmem>>, %arg3: memref<1x16xf32, #tpu.memory_space<vmem>>, %arg4: memref<16x256xf32, #tpu.memory_space<vmem>>, %arg5: memref<1x256xf32, #tpu.memory_space<vmem>>, %arg6: memref<2x256x64xf32, #tpu.memory_space<vmem>>) attributes {dimension_semantics = [#tpu.dimension_semantics<parallel>], iteration_bounds = array<i64: 1>, scalar_prefetch = 0 : i64, scratch_operands = 0 : i64, tpu.core_type = #tpu.core_type<tc>, window_params = [{transform_indices = @transform_0, window_bounds = array<i64: 2, 256, 64>}, {pipeline_mode = #tpu.pipeline_mode<synchronous>, transform_indices = @transform_1, window_bounds = array<i64: 256, 16>}, {pipeline_mode = #tpu.pipeline_mode<synchronous>, transform_indices = @transform_2, window_bounds = array<i64: 1, 16>}, {pipeline_mode = #tpu.pipeline_mode<synchronous>, transform_indices = @transform_3, window_bounds = array<i64: 16, 256>}, {pipeline_mode = #tpu.pipeline_mode<synchronous>, transform_indices = @transform_4, window_bounds = array<i64: 1, 256>}, {transform_indices = @transform_5, window_bounds = array<i64: 2, 256, 64>}]} {
    %c0 = arith.constant 0 : index
    %c0_0 = arith.constant 0 : index
    %c0_1 = arith.constant 0 : index
    %0 = vector.load %arg1[%c0, %c0_0, %c0_1] : memref<2x256x64xf32, #tpu.memory_space<vmem>>, vector<2x256x64xf32>
    %cst = arith.constant dense<0.000000e+00> : vector<2x256xf32>
    %1 = vector.multi_reduction <add>, %0, %cst [2] : vector<2x256x64xf32> to vector<2x256xf32>
    %cst_2 = arith.constant 1.562500e-02 : f32
    %2 = vector.broadcast %cst_2 : f32 to vector<2x256xf32>
    %3 = arith.mulf %1, %2 : vector<2x256xf32>
    %c0_3 = arith.constant 0 : index
    %c0_4 = arith.constant 0 : index
    %4 = vector.load %arg2[%c0_3, %c0_4] : memref<256x16xf32, #tpu.memory_space<vmem>>, vector<256x16xf32>
    %cst_5 = arith.constant dense<0.000000e+00> : vector<2x16xf32>
    %5 = tpu.matmul %3, %4, %cst_5 {dimension_numbers = #tpu.dot_dimension_numbers<[1], [0], [0], [1], [0, 0, 1, 1], [], []>} : vector<2x256xf32>, vector<256x16xf32>, vector<2x16xf32> -> vector<2x16xf32>
    %c0_6 = arith.constant 0 : index
    %c0_7 = arith.constant 0 : index
    %6 = vector.load %arg3[%c0_6, %c0_7] : memref<1x16xf32, #tpu.memory_space<vmem>>, vector<1x16xf32>
    %7 = vector.broadcast %6 : vector<1x16xf32> to vector<2x16xf32>
    %8 = arith.addf %5, %7 : vector<2x16xf32>
    %cst_8 = arith.constant 0.000000e+00 : f32
    %9 = vector.broadcast %cst_8 : f32 to vector<2x16xf32>
    %10 = arith.maximumf %8, %9 : vector<2x16xf32>
    %c0_9 = arith.constant 0 : index
    %c0_10 = arith.constant 0 : index
    %11 = vector.load %arg4[%c0_9, %c0_10] : memref<16x256xf32, #tpu.memory_space<vmem>>, vector<16x256xf32>
    %cst_11 = arith.constant dense<0.000000e+00> : vector<2x256xf32>
    %12 = tpu.matmul %10, %11, %cst_11 {dimension_numbers = #tpu.dot_dimension_numbers<[1], [0], [0], [1], [0, 0, 1, 1], [], []>} : vector<2x16xf32>, vector<16x256xf32>, vector<2x256xf32> -> vector<2x256xf32>
    %c0_12 = arith.constant 0 : index
    %c0_13 = arith.constant 0 : index
    %13 = vector.load %arg5[%c0_12, %c0_13] : memref<1x256xf32, #tpu.memory_space<vmem>>, vector<1x256xf32>
    %14 = vector.broadcast %13 : vector<1x256xf32> to vector<2x256xf32>
    %15 = arith.addf %12, %14 : vector<2x256xf32>
    %16 = arith.negf %15 : vector<2x256xf32>
    %17 = math.exp %16 : vector<2x256xf32>
    %cst_14 = arith.constant 1.000000e+00 : f32
    %18 = vector.broadcast %cst_14 : f32 to vector<2x256xf32>
    %19 = arith.addf %18, %17 : vector<2x256xf32>
    %20 = arith.divf %18, %19 : vector<2x256xf32>
    %21 = vector.shape_cast %20 : vector<2x256xf32> to vector<2x256x1xf32>
    %22 = vector.broadcast %21 : vector<2x256x1xf32> to vector<2x256x64xf32>
    %23 = arith.mulf %0, %22 : vector<2x256x64xf32>
    %c0_15 = arith.constant 0 : index
    %c0_16 = arith.constant 0 : index
    %c0_17 = arith.constant 0 : index
    %24 = vector.load %arg6[%c0_15, %c0_16, %c0_17] : memref<2x256x64xf32, #tpu.memory_space<vmem>>, vector<2x256x64xf32>
    tpu.vector_store %arg6[%c0_15, %c0_16, %c0_17], %23 {strides = array<i32>} : memref<2x256x64xf32, #tpu.memory_space<vmem>>, vector<2x256x64xf32>,
    return
  }
  func.func @transform_0(%arg0: i32) -> (i32, i32, i32) {
    %c0_i32 = arith.constant 0 : i32
    %c0_i32_0 = arith.constant 0 : i32
    %c0_i32_1 = arith.constant 0 : i32
    return %arg0, %c0_i32, %c0_i32_0 : i32, i32, i32
  }
  func.func @transform_1(%arg0: i32) -> (i32, i32) {
    %c0_i32 = arith.constant 0 : i32
    %c0_i32_0 = arith.constant 0 : i32
    %c0_i32_1 = arith.constant 0 : i32
    return %c0_i32, %c0_i32_0 : i32, i32
  }
  func.func @transform_2(%arg0: i32) -> (i32, i32) {
    %c0_i32 = arith.constant 0 : i32
    %c0_i32_0 = arith.constant 0 : i32
    %c0_i32_1 = arith.constant 0 : i32
    return %c0_i32, %c0_i32_0 : i32, i32
  }
  func.func @transform_3(%arg0: i32) -> (i32, i32) {
    %c0_i32 = arith.constant 0 : i32
    %c0_i32_0 = arith.constant 0 : i32
    %c0_i32_1 = arith.constant 0 : i32
    return %c0_i32, %c0_i32_0 : i32, i32
  }
  func.func @transform_4(%arg0: i32) -> (i32, i32) {
    %c0_i32 = arith.constant 0 : i32
    %c0_i32_0 = arith.constant 0 : i32
    %c0_i32_1 = arith.constant 0 : i32
    return %c0_i32, %c0_i32_0 : i32, i32
  }
  func.func @transform_5(%arg0: i32) -> (i32, i32, i32) {
    %c0_i32 = arith.constant 0 : i32
    %c0_i32_0 = arith.constant 0 : i32
    %c0_i32_1 = arith.constant 0 : i32
    return %arg0, %c0_i32, %c0_i32_0 : i32, i32, i32
  }
}

</mosaic_0001>

<llo_original>
// kernel: tpu_custom_call.1
$region0: #{tpu_custom_call.1}
  #allocation0 [shape = 'u32[]', space=smem, size = 0x4, offset = 0x4, fixed_abs, tag = 'smem constant byte address 0x4 - core index']
  #allocation1 [shape = 'u32[144,128]{1,0:T(1,128)}', space=vmem, size = 0x12000, scoped, tag = 'internal scratch']
  %s0 = inlined_call_operand.vmem [shape: f32[2,256,64], index: 0, kind: input, shape index: {}]
  %s1 = inlined_call_operand.vmem [shape: f32[256,16], index: 1, kind: input, shape index: {}]
  %s2 = inlined_call_operand.vmem [shape: f32[1,16], index: 2, kind: input, shape index: {}]
  %s3 = inlined_call_operand.vmem [shape: f32[16,256], index: 3, kind: input, shape index: {}]
  %s4 = inlined_call_operand.vmem [shape: f32[1,256], index: 4, kind: input, shape index: {}]
  %s5 = inlined_call_operand.vmem [shape: f32[2,256,64], index: 5, kind: output, shape index: {}]
  %s6 = sld [smem:[#allocation0]]
  $region30: #{tpu_custom_call.1} parent=0
    _
  %s8 = ssub.s32 1, %s6
  %s9 = scalar_select 0, %s8, %s6
  // Predicated region
  $region2: #{tpu_custom_call.1} parent=0 // pred_check
    _
  $region3: #{tpu_custom_call.1} parent=0 // pred_check_branch
    %11 = sbr.rel (0) target = $region5
  $region4: #{tpu_custom_call.1} parent=0 // pred_region
    _
  $region5: #{tpu_custom_call.1} parent=0 // pred_fallthru
    _
  // Predicated region
  $region6: #{tpu_custom_call.1} parent=0 // pred_check
    _
  $region7: #{tpu_custom_call.1} parent=0 // pred_check_branch
    %13 = sbr.rel (0) target = $region9
  $region8: #{tpu_custom_call.1} parent=0 // pred_region
    _
  $region9: #{tpu_custom_call.1} parent=0 // pred_fallthru
    _
  // Predicated region
  $region10: #{tpu_custom_call.1} parent=0 // pred_check
    _
  $region11: #{tpu_custom_call.1} parent=0 // pred_check_branch
    %15 = sbr.rel (0) target = $region13
  $region12: #{tpu_custom_call.1} parent=0 // pred_region
    _
  $region13: #{tpu_custom_call.1} parent=0 // pred_fallthru
    _
  // Predicated region
  $region14: #{tpu_custom_call.1} parent=0 // pred_check
    _
  $region15: #{tpu_custom_call.1} parent=0 // pred_check_branch
    %17 = sbr.rel (0) target = $region17
  $region16: #{tpu_custom_call.1} parent=0 // pred_region
    _
  $region17: #{tpu_custom_call.1} parent=0 // pred_fallthru
    _
  // Predicated region
  $region18: #{tpu_custom_call.1} parent=0 // pred_check
    _
  $region19: #{tpu_custom_call.1} parent=0 // pred_check_branch
    %19 = sbr.rel (0) target = $region21
  $region20: #{tpu_custom_call.1} parent=0 // pred_region
    _
  $region21: #{tpu_custom_call.1} parent=0 // pred_fallthru
    _
  %v20 = vld [vmem:[%s0] sm:$0xff]
  %v21 = vld [vmem:[%s0 + $0x8] sm:$0xff]
  %v22 = vld [vmem:[%s0 + $0x10] sm:$0xff]
  %v23 = vld [vmem:[%s0 + $0x18] sm:$0xff]
  %v24 = vld [vmem:[%s0 + $0x20] sm:$0xff]
  %v25 = vld [vmem:[%s0 + $0x28] sm:$0xff]
  %v26 = vld [vmem:[%s0 + $0x30] sm:$0xff]
  %v27 = vld [vmem:[%s0 + $0x38] sm:$0xff]
  %v28 = vld [vmem:[%s0 + $0x40] sm:$0xff]
  %v29 = vld [vmem:[%s0 + $0x48] sm:$0xff]
  %v30 = vld [vmem:[%s0 + $0x50] sm:$0xff]
  %v31 = vld [vmem:[%s0 + $0x58] sm:$0xff]
  %v32 = vld [vmem:[%s0 + $0x60] sm:$0xff]
  %v33 = vld [vmem:[%s0 + $0x68] sm:$0xff]
  %v34 = vld [vmem:[%s0 + $0x70] sm:$0xff]
  %v35 = vld [vmem:[%s0 + $0x78] sm:$0xff]
  %v36 = vld [vmem:[%s0 + $0x80] sm:$0xff]
  %v37 = vld [vmem:[%s0 + $0x88] sm:$0xff]
  %v38 = vld [vmem:[%s0 + $0x90] sm:$0xff]
  %v39 = vld [vmem:[%s0 + $0x98] sm:$0xff]
  %v40 = vld [vmem:[%s0 + $0xa0] sm:$0xff]
  %v41 = vld [vmem:[%s0 + $0xa8] sm:$0xff]
  %v42 = vld [vmem:[%s0 + $0xb0] sm:$0xff]
  %v43 = vld [vmem:[%s0 + $0xb8] sm:$0xff]
  %v44 = vld [vmem:[%s0 + $0xc0] sm:$0xff]
  %v45 = vld [vmem:[%s0 + $0xc8] sm:$0xff]
  %v46 = vld [vmem:[%s0 + $0xd0] sm:$0xff]
  %v47 = vld [vmem:[%s0 + $0xd8] sm:$0xff]
  %v48 = vld [vmem:[%s0 + $0xe0] sm:$0xff]
  %v49 = vld [vmem:[%s0 + $0xe8] sm:$0xff]
  %v50 = vld [vmem:[%s0 + $0xf0] sm:$0xff]
  %v51 = vld [vmem:[%s0 + $0xf8] sm:$0xff]
  %v52 = vld [vmem:[%s0 + $0x100] sm:$0xff]
  %v53 = vld [vmem:[%s0 + $0x108] sm:$0xff]
  %v54 = vld [vmem:[%s0 + $0x110] sm:$0xff]
  %v55 = vld [vmem:[%s0 + $0x118] sm:$0xff]
  %v56 = vld [vmem:[%s0 + $0x120] sm:$0xff]
  %v57 = vld [vmem:[%s0 + $0x128] sm:$0xff]
  %v58 = vld [vmem:[%s0 + $0x130] sm:$0xff]
  %v59 = vld [vmem:[%s0 + $0x138] sm:$0xff]
  %v60 = vld [vmem:[%s0 + $0x140] sm:$0xff]
  %v61 = vld [vmem:[%s0 + $0x148] sm:$0xff]
  %v62 = vld [vmem:[%s0 + $0x150] sm:$0xff]
  %v63 = vld [vmem:[%s0 + $0x158] sm:$0xff]
  %v64 = vld [vmem:[%s0 + $0x160] sm:$0xff]
  %v65 = vld [vmem:[%s0 + $0x168] sm:$0xff]
  %v66 = vld [vmem:[%s0 + $0x170] sm:$0xff]
  %v67 = vld [vmem:[%s0 + $0x178] sm:$0xff]
  %v68 = vld [vmem:[%s0 + $0x180] sm:$0xff]
  %v69 = vld [vmem:[%s0 + $0x188] sm:$0xff]
  %v70 = vld [vmem:[%s0 + $0x190] sm:$0xff]
  %v71 = vld [vmem:[%s0 + $0x198] sm:$0xff]
  %v72 = vld [vmem:[%s0 + $0x1a0] sm:$0xff]
  %v73 = vld [vmem:[%s0 + $0x1a8] sm:$0xff]
  %v74 = vld [vmem:[%s0 + $0x1b0] sm:$0xff]
  %v75 = vld [vmem:[%s0 + $0x1b8] sm:$0xff]
  %v76 = vld [vmem:[%s0 + $0x1c0] sm:$0xff]
  %v77 = vld [vmem:[%s0 + $0x1c8] sm:$0xff]
  %v78 = vld [vmem:[%s0 + $0x1d0] sm:$0xff]
  %v79 = vld [vmem:[%s0 + $0x1d8] sm:$0xff]
  %v80 = vld [vmem:[%s0 + $0x1e0] sm:$0xff]
  %v81 = vld [vmem:[%s0 + $0x1e8] sm:$0xff]
  %v82 = vld [vmem:[%s0 + $0x1f0] sm:$0xff]
  %v83 = vld [vmem:[%s0 + $0x1f8] sm:$0xff]
  %vm84 = vcmask 523264
  %v85 = vsel %vm84, %v20, 0.0
  %86 = vadd.xlane.f32.xlu0 %v85
  %v87 = vpop.xlane.xlu0 %86
  %v88 = vsel %vm84, %v21, 0.0
  %89 = vadd.xlane.f32.xlu0 %v88
  %v90 = vpop.xlane.xlu0 %89
  %v91 = vsel %vm84, %v22, 0.0
  %92 = vadd.xlane.f32.xlu0 %v91
  %v93 = vpop.xlane.xlu0 %92
  %v94 = vsel %vm84, %v23, 0.0
  %95 = vadd.xlane.f32.xlu0 %v94
  %v96 = vpop.xlane.xlu0 %95
  %v97 = vsel %vm84, %v24, 0.0
  %98 = vadd.xlane.f32.xlu0 %v97
  %v99 = vpop.xlane.xlu0 %98
  %v100 = vsel %vm84, %v25, 0.0
  %101 = vadd.xlane.f32.xlu0 %v100
  %v102 = vpop.xlane.xlu0 %101
  %v103 = vsel %vm84, %v26, 0.0
  %104 = vadd.xlane.f32.xlu0 %v103
  %v105 = vpop.xlane.xlu0 %104
  %v106 = vsel %vm84, %v27, 0.0
  %107 = vadd.xlane.f32.xlu0 %v106
  %v108 = vpop.xlane.xlu0 %107
  %v109 = vsel %vm84, %v28, 0.0
  %110 = vadd.xlane.f32.xlu0 %v109
  %v111 = vpop.xlane.xlu0 %110
  %v112 = vsel %vm84, %v29, 0.0
  %113 = vadd.xlane.f32.xlu0 %v112
  %v114 = vpop.xlane.xlu0 %113
  %v115 = vsel %vm84, %v30, 0.0
  %116 = vadd.xlane.f32.xlu0 %v115
  %v117 = vpop.xlane.xlu0 %116
  %v118 = vsel %vm84, %v31, 0.0
  %119 = vadd.xlane.f32.xlu0 %v118
  %v120 = vpop.xlane.xlu0 %119
  %v121 = vsel %vm84, %v32, 0.0
  %122 = vadd.xlane.f32.xlu0 %v121
  %v123 = vpop.xlane.xlu0 %122
  %v124 = vsel %vm84, %v33, 0.0
  %125 = vadd.xlane.f32.xlu0 %v124
  %v126 = vpop.xlane.xlu0 %125
  %v127 = vsel %vm84, %v34, 0.0
  %128 = vadd.xlane.f32.xlu0 %v127
  %v129 = vpop.xlane.xlu0 %128
  %v130 = vsel %vm84, %v35, 0.0
  %131 = vadd.xlane.f32.xlu0 %v130
  %v132 = vpop.xlane.xlu0 %131
  %v133 = vsel %vm84, %v36, 0.0
  %134 = vadd.xlane.f32.xlu0 %v133
  %v135 = vpop.xlane.xlu0 %134
  %v136 = vsel %vm84, %v37, 0.0
  %137 = vadd.xlane.f32.xlu0 %v136
  %v138 = vpop.xlane.xlu0 %137
  %v139 = vsel %vm84, %v38, 0.0
  %140 = vadd.xlane.f32.xlu0 %v139
  %v141 = vpop.xlane.xlu0 %140
  %v142 = vsel %vm84, %v39, 0.0
  %143 = vadd.xlane.f32.xlu0 %v142
  %v144 = vpop.xlane.xlu0 %143
  %v145 = vsel %vm84, %v40, 0.0
  %146 = vadd.xlane.f32.xlu0 %v145
  %v147 = vpop.xlane.xlu0 %146
  %v148 = vsel %vm84, %v41, 0.0
  %149 = vadd.xlane.f32.xlu0 %v148
  %v150 = vpop.xlane.xlu0 %149
  %v151 = vsel %vm84, %v42, 0.0
  %152 = vadd.xlane.f32.xlu0 %v151
  %v153 = vpop.xlane.xlu0 %152
  %v154 = vsel %vm84, %v43, 0.0
  %155 = vadd.xlane.f32.xlu0 %v154
  %v156 = vpop.xlane.xlu0 %155
  %v157 = vsel %vm84, %v44, 0.0
  %158 = vadd.xlane.f32.xlu0 %v157
  %v159 = vpop.xlane.xlu0 %158
  %v160 = vsel %vm84, %v45, 0.0
  %161 = vadd.xlane.f32.xlu0 %v160
  %v162 = vpop.xlane.xlu0 %161
  %v163 = vsel %vm84, %v46, 0.0
  %164 = vadd.xlane.f32.xlu0 %v163
  %v165 = vpop.xlane.xlu0 %164
  %v166 = vsel %vm84, %v47, 0.0
  %167 = vadd.xlane.f32.xlu0 %v166
  %v168 = vpop.xlane.xlu0 %167
  %v169 = vsel %vm84, %v48, 0.0
  %170 = vadd.xlane.f32.xlu0 %v169
  %v171 = vpop.xlane.xlu0 %170
  %v172 = vsel %vm84, %v49, 0.0
  %173 = vadd.xlane.f32.xlu0 %v172
  %v174 = vpop.xlane.xlu0 %173
  %v175 = vsel %vm84, %v50, 0.0
  %176 = vadd.xlane.f32.xlu0 %v175
  %v177 = vpop.xlane.xlu0 %176
  %v178 = vsel %vm84, %v51, 0.0
  %179 = vadd.xlane.f32.xlu0 %v178
  %v180 = vpop.xlane.xlu0 %179
  %v181 = vsel %vm84, %v52, 0.0
  %182 = vadd.xlane.f32.xlu0 %v181
  %v183 = vpop.xlane.xlu0 %182
  %v184 = vsel %vm84, %v53, 0.0
  %185 = vadd.xlane.f32.xlu0 %v184
  %v186 = vpop.xlane.xlu0 %185
  %v187 = vsel %vm84, %v54, 0.0
  %188 = vadd.xlane.f32.xlu0 %v187
  %v189 = vpop.xlane.xlu0 %188
  %v190 = vsel %vm84, %v55, 0.0
  %191 = vadd.xlane.f32.xlu0 %v190
  %v192 = vpop.xlane.xlu0 %191
  %v193 = vsel %vm84, %v56, 0.0
  %194 = vadd.xlane.f32.xlu0 %v193
  %v195 = vpop.xlane.xlu0 %194
  %v196 = vsel %vm84, %v57, 0.0
  %197 = vadd.xlane.f32.xlu0 %v196
  %v198 = vpop.xlane.xlu0 %197
  %v199 = vsel %vm84, %v58, 0.0
  %200 = vadd.xlane.f32.xlu0 %v199
  %v201 = vpop.xlane.xlu0 %200
  %v202 = vsel %vm84, %v59, 0.0
  %203 = vadd.xlane.f32.xlu0 %v202
  %v204 = vpop.xlane.xlu0 %203
  %v205 = vsel %vm84, %v60, 0.0
  %206 = vadd.xlane.f32.xlu0 %v205
  %v207 = vpop.xlane.xlu0 %206
  %v208 = vsel %vm84, %v61, 0.0
  %209 = vadd.xlane.f32.xlu0 %v208
  %v210 = vpop.xlane.xlu0 %209
  %v211 = vsel %vm84, %v62, 0.0
  %212 = vadd.xlane.f32.xlu0 %v211
  %v213 = vpop.xlane.xlu0 %212
  %v214 = vsel %vm84, %v63, 0.0
  %215 = vadd.xlane.f32.xlu0 %v214
  %v216 = vpop.xlane.xlu0 %215
  %v217 = vsel %vm84, %v64, 0.0
  %218 = vadd.xlane.f32.xlu0 %v217
  %v219 = vpop.xlane.xlu0 %218
  %v220 = vsel %vm84, %v65, 0.0
  %221 = vadd.xlane.f32.xlu0 %v220
  %v222 = vpop.xlane.xlu0 %221
  %v223 = vsel %vm84, %v66, 0.0
  %224 = vadd.xlane.f32.xlu0 %v223
  %v225 = vpop.xlane.xlu0 %224
  %v226 = vsel %vm84, %v67, 0.0
  %227 = vadd.xlane.f32.xlu0 %v226
  %v228 = vpop.xlane.xlu0 %227
  %v229 = vsel %vm84, %v68, 0.0
  %230 = vadd.xlane.f32.xlu0 %v229
  %v231 = vpop.xlane.xlu0 %230
  %v232 = vsel %vm84, %v69, 0.0
  %233 = vadd.xlane.f32.xlu0 %v232
  %v234 = vpop.xlane.xlu0 %233
  %v235 = vsel %vm84, %v70, 0.0
  %236 = vadd.xlane.f32.xlu0 %v235
  %v237 = vpop.xlane.xlu0 %236
  %v238 = vsel %vm84, %v71, 0.0
  %239 = vadd.xlane.f32.xlu0 %v238
  %v240 = vpop.xlane.xlu0 %239
  %v241 = vsel %vm84, %v72, 0.0
  %242 = vadd.xlane.f32.xlu0 %v241
  %v243 = vpop.xlane.xlu0 %242
  %v244 = vsel %vm84, %v73, 0.0
  %245 = vadd.xlane.f32.xlu0 %v244
  %v246 = vpop.xlane.xlu0 %245
  %v247 = vsel %vm84, %v74, 0.0
  %248 = vadd.xlane.f32.xlu0 %v247
  %v249 = vpop.xlane.xlu0 %248
  %v250 = vsel %vm84, %v75, 0.0
  %251 = vadd.xlane.f32.xlu0 %v250
  %v252 = vpop.xlane.xlu0 %251
  %v253 = vsel %vm84, %v76, 0.0
  %254 = vadd.xlane.f32.xlu0 %v253
  %v255 = vpop.xlane.xlu0 %254
  %v256 = vsel %vm84, %v77, 0.0
  %257 = vadd.xlane.f32.xlu0 %v256
  %v258 = vpop.xlane.xlu0 %257
  %v259 = vsel %vm84, %v78, 0.0
  %260 = vadd.xlane.f32.xlu0 %v259
  %v261 = vpop.xlane.xlu0 %260
  %v262 = vsel %vm84, %v79, 0.0
  %263 = vadd.xlane.f32.xlu0 %v262
  %v264 = vpop.xlane.xlu0 %263
  %v265 = vsel %vm84, %v80, 0.0
  %266 = vadd.xlane.f32.xlu0 %v265
  %v267 = vpop.xlane.xlu0 %266
  %v268 = vsel %vm84, %v81, 0.0
  %269 = vadd.xlane.f32.xlu0 %v268
  %v270 = vpop.xlane.xlu0 %269
  %v271 = vsel %vm84, %v82, 0.0
  %272 = vadd.xlane.f32.xlu0 %v271
  %v273 = vpop.xlane.xlu0 %272
  %v274 = vsel %vm84, %v83, 0.0
  %275 = vadd.xlane.f32.xlu0 %v274
  %v276 = vpop.xlane.xlu0 %275
  %v277 = vmul.f32 %v87, 0.015625
  %v278 = vmul.f32 %v90, 0.015625
  %v279 = vmul.f32 %v93, 0.015625
  %v280 = vmul.f32 %v96, 0.015625
  %v281 = vmul.f32 %v99, 0.015625
  %v282 = vmul.f32 %v102, 0.015625
  %v283 = vmul.f32 %v105, 0.015625
  %v284 = vmul.f32 %v108, 0.015625
  %v285 = vmul.f32 %v111, 0.015625
  %v286 = vmul.f32 %v114, 0.015625
  %v287 = vmul.f32 %v117, 0.015625
  %v288 = vmul.f32 %v120, 0.015625
  %v289 = vmul.f32 %v123, 0.015625
  %v290 = vmul.f32 %v126, 0.015625
  %v291 = vmul.f32 %v129, 0.015625
  %v292 = vmul.f32 %v132, 0.015625
  %v293 = vmul.f32 %v135, 0.015625
  %v294 = vmul.f32 %v138, 0.015625
  %v295 = vmul.f32 %v141, 0.015625
  %v296 = vmul.f32 %v144, 0.015625
  %v297 = vmul.f32 %v147, 0.015625
  %v298 = vmul.f32 %v150, 0.015625
  %v299 = vmul.f32 %v153, 0.015625
  %v300 = vmul.f32 %v156, 0.015625
  %v301 = vmul.f32 %v159, 0.015625
  %v302 = vmul.f32 %v162, 0.015625
  %v303 = vmul.f32 %v165, 0.015625
  %v304 = vmul.f32 %v168, 0.015625
  %v305 = vmul.f32 %v171, 0.015625
  %v306 = vmul.f32 %v174, 0.015625
  %v307 = vmul.f32 %v177, 0.015625
  %v308 = vmul.f32 %v180, 0.015625
  %v309 = vmul.f32 %v183, 0.015625
  %v310 = vmul.f32 %v186, 0.015625
  %v311 = vmul.f32 %v189, 0.015625
  %v312 = vmul.f32 %v192, 0.015625
  %v313 = vmul.f32 %v195, 0.015625
  %v314 = vmul.f32 %v198, 0.015625
  %v315 = vmul.f32 %v201, 0.015625
  %v316 = vmul.f32 %v204, 0.015625
  %v317 = vmul.f32 %v207, 0.015625
  %v318 = vmul.f32 %v210, 0.015625
  %v319 = vmul.f32 %v213, 0.015625
  %v320 = vmul.f32 %v216, 0.015625
  %v321 = vmul.f32 %v219, 0.015625
  %v322 = vmul.f32 %v222, 0.015625
  %v323 = vmul.f32 %v225, 0.015625
  %v324 = vmul.f32 %v228, 0.015625
  %v325 = vmul.f32 %v231, 0.015625
  %v326 = vmul.f32 %v234, 0.015625
  %v327 = vmul.f32 %v237, 0.015625
  %v328 = vmul.f32 %v240, 0.015625
  %v329 = vmul.f32 %v243, 0.015625
  %v330 = vmul.f32 %v246, 0.015625
  %v331 = vmul.f32 %v249, 0.015625
  %v332 = vmul.f32 %v252, 0.015625
  %v333 = vmul.f32 %v255, 0.015625
  %v334 = vmul.f32 %v258, 0.015625
  %v335 = vmul.f32 %v261, 0.015625
  %v336 = vmul.f32 %v264, 0.015625
  %v337 = vmul.f32 %v267, 0.015625
  %v338 = vmul.f32 %v270, 0.015625
  %v339 = vmul.f32 %v273, 0.015625
  %v340 = vmul.f32 %v276, 0.015625
  %v341 = vld [vmem:[%s1] sm:$0xff]
  %v342 = vld [vmem:[%s1 + $0x8] sm:$0xff]
  %v343 = vld [vmem:[%s1 + $0x10] sm:$0xff]
  %v344 = vld [vmem:[%s1 + $0x18] sm:$0xff]
  %v345 = vld [vmem:[%s1 + $0x20] sm:$0xff]
  %v346 = vld [vmem:[%s1 + $0x28] sm:$0xff]
  %v347 = vld [vmem:[%s1 + $0x30] sm:$0xff]
  %v348 = vld [vmem:[%s1 + $0x38] sm:$0xff]
  %v349 = vld [vmem:[%s1 + $0x40] sm:$0xff]
  %v350 = vld [vmem:[%s1 + $0x48] sm:$0xff]
  %v351 = vld [vmem:[%s1 + $0x50] sm:$0xff]
  %v352 = vld [vmem:[%s1 + $0x58] sm:$0xff]
  %v353 = vld [vmem:[%s1 + $0x60] sm:$0xff]
  %v354 = vld [vmem:[%s1 + $0x68] sm:$0xff]
  %v355 = vld [vmem:[%s1 + $0x70] sm:$0xff]
  %v356 = vld [vmem:[%s1 + $0x78] sm:$0xff]
  %v357 = vld [vmem:[%s1 + $0x80] sm:$0xff]
  %v358 = vld [vmem:[%s1 + $0x88] sm:$0xff]
  %v359 = vld [vmem:[%s1 + $0x90] sm:$0xff]
  %v360 = vld [vmem:[%s1 + $0x98] sm:$0xff]
  %v361 = vld [vmem:[%s1 + $0xa0] sm:$0xff]
  %v362 = vld [vmem:[%s1 + $0xa8] sm:$0xff]
  %v363 = vld [vmem:[%s1 + $0xb0] sm:$0xff]
  %v364 = vld [vmem:[%s1 + $0xb8] sm:$0xff]
  %v365 = vld [vmem:[%s1 + $0xc0] sm:$0xff]
  %v366 = vld [vmem:[%s1 + $0xc8] sm:$0xff]
  %v367 = vld [vmem:[%s1 + $0xd0] sm:$0xff]
  %v368 = vld [vmem:[%s1 + $0xd8] sm:$0xff]
  %v369 = vld [vmem:[%s1 + $0xe0] sm:$0xff]
  %v370 = vld [vmem:[%s1 + $0xe8] sm:$0xff]
  %v371 = vld [vmem:[%s1 + $0xf0] sm:$0xff]
  %v372 = vld [vmem:[%s1 + $0xf8] sm:$0xff]
  %v373 = vld [vmem:[%s2] sm:$0x1]
  %v375 = vlaneseq
  %v376 = vshrl.u32 %v375, 7
  %v377 = vsub.s32 0, %v376
  %v378 = vrot.slane %v373, %v377
  %v444 = vlaneseq
  %v445 = vand.u32 %v444, 127
  %v446 = vlaneseq
  %v447 = vshrl.u32 %v446, 7
  %v448 = vsub.s32 %v445, %v447
  %v449 = vrot.slane %v277, %v448
  %v450 = vadd.s32 %v445, 4294967288
  %v451 = vlaneseq
  %v452 = vshrl.u32 %v451, 7
  %v453 = vsub.s32 %v450, %v452
  %v454 = vrot.slane %v278, %v453
  %vm455 = vcmask 130112
  %v456 = vsel %vm455, %v454, %v449
  %v457 = vadd.s32 %v445, 4294967280
  %v458 = vlaneseq
  %v459 = vshrl.u32 %v458, 7
  %v460 = vsub.s32 %v457, %v459
  %v461 = vrot.slane %v279, %v460
  %vm462 = vcmask 195712
  %v463 = vsel %vm462, %v461, %v456
  %v464 = vadd.s32 %v445, 4294967272
  %v465 = vlaneseq
  %v466 = vshrl.u32 %v465, 7
  %v467 = vsub.s32 %v464, %v466
  %v468 = vrot.slane %v280, %v467
  %vm469 = vcmask 261312
  %v470 = vsel %vm469, %v468, %v463
  %v471 = vadd.s32 %v445, 4294967264
  %v472 = vlaneseq
  %v473 = vshrl.u32 %v472, 7
  %v474 = vsub.s32 %v471, %v473
  %v475 = vrot.slane %v281, %v474
  %vm476 = vcmask 326912
  %v477 = vsel %vm476, %v475, %v470
  %v478 = vadd.s32 %v445, 4294967256
  %v479 = vlaneseq
  %v480 = vshrl.u32 %v479, 7
  %v481 = vsub.s32 %v478, %v480
  %v482 = vrot.slane %v282, %v481
  %vm483 = vcmask 392512
  %v484 = vsel %vm483, %v482, %v477
  %v485 = vadd.s32 %v445, 4294967248
  %v486 = vlaneseq
  %v487 = vshrl.u32 %v486, 7
  %v488 = vsub.s32 %v485, %v487
  %v489 = vrot.slane %v283, %v488
  %vm490 = vcmask 458112
  %v491 = vsel %vm490, %v489, %v484
  %v492 = vadd.s32 %v445, 4294967240
  %v493 = vlaneseq
  %v494 = vshrl.u32 %v493, 7
  %v495 = vsub.s32 %v492, %v494
  %v496 = vrot.slane %v284, %v495
  %vm497 = vcmask 523712
  %v498 = vsel %vm497, %v496, %v491
  %v499 = vadd.s32 %v445, 4294967232
  %v500 = vlaneseq
  %v501 = vshrl.u32 %v500, 7
  %v502 = vsub.s32 %v499, %v501
  %v503 = vrot.slane %v285, %v502
  %vm504 = vcmask 589312
  %v505 = vsel %vm504, %v503, %v498
  %v506 = vadd.s32 %v445, 4294967224
  %v507 = vlaneseq
  %v508 = vshrl.u32 %v507, 7
  %v509 = vsub.s32 %v506, %v508
  %v510 = vrot.slane %v286, %v509
  %vm511 = vcmask 654912
  %v512 = vsel %vm511, %v510, %v505
  %v513 = vadd.s32 %v445, 4294967216
  %v514 = vlaneseq
  %v515 = vshrl.u32 %v514, 7
  %v516 = vsub.s32 %v513, %v515
  %v517 = vrot.slane %v287, %v516
  %vm518 = vcmask 720512
  %v519 = vsel %vm518, %v517, %v512
  %v520 = vadd.s32 %v445, 4294967208
  %v521 = vlaneseq
  %v522 = vshrl.u32 %v521, 7
  %v523 = vsub.s32 %v520, %v522
  %v524 = vrot.slane %v288, %v523
  %vm525 = vcmask 786112
  %v526 = vsel %vm525, %v524, %v519
  %v527 = vadd.s32 %v445, 4294967200
  %v528 = vlaneseq
  %v529 = vshrl.u32 %v528, 7
  %v530 = vsub.s32 %v527, %v529
  %v531 = vrot.slane %v289, %v530
  %vm532 = vcmask 851712
  %v533 = vsel %vm532, %v531, %v526
  %v534 = vadd.s32 %v445, 4294967192
  %v535 = vlaneseq
  %v536 = vshrl.u32 %v535, 7
  %v537 = vsub.s32 %v534, %v536
  %v538 = vrot.slane %v290, %v537
  %vm539 = vcmask 917312
  %v540 = vsel %vm539, %v538, %v533
  %v541 = vadd.s32 %v445, 4294967184
  %v542 = vlaneseq
  %v543 = vshrl.u32 %v542, 7
  %v544 = vsub.s32 %v541, %v543
  %v545 = vrot.slane %v291, %v544
  %vm546 = vcmask 982912
  %v547 = vsel %vm546, %v545, %v540
  %v548 = vadd.s32 %v445, 4294967176
  %v549 = vlaneseq
  %v550 = vshrl.u32 %v549, 7
  %v551 = vsub.s32 %v548, %v550
  %v552 = vrot.slane %v292, %v551
  %vm553 = vcmask 1048512
  %v554 = vsel %vm553, %v552, %v547
  %v555 = vlaneseq
  %v556 = vshrl.u32 %v555, 7
  %v557 = vsub.s32 %v445, %v556
  %v558 = vrot.slane %v293, %v557
  %v559 = vlaneseq
  %v560 = vshrl.u32 %v559, 7
  %v561 = vsub.s32 %v450, %v560
  %v562 = vrot.slane %v294, %v561
  %v563 = vsel %vm455, %v562, %v558
  %v564 = vlaneseq
  %v565 = vshrl.u32 %v564, 7
  %v566 = vsub.s32 %v457, %v565
  %v567 = vrot.slane %v295, %v566
  %v568 = vsel %vm462, %v567, %v563
  %v569 = vlaneseq
  %v570 = vshrl.u32 %v569, 7
  %v571 = vsub.s32 %v464, %v570
  %v572 = vrot.slane %v296, %v571
  %v573 = vsel %vm469, %v572, %v568
  %v574 = vlaneseq
  %v575 = vshrl.u32 %v574, 7
  %v576 = vsub.s32 %v471, %v575
  %v577 = vrot.slane %v297, %v576
  %v578 = vsel %vm476, %v577, %v573
  %v579 = vlaneseq
  %v580 = vshrl.u32 %v579, 7
  %v581 = vsub.s32 %v478, %v580
  %v582 = vrot.slane %v298, %v581
  %v583 = vsel %vm483, %v582, %v578
  %v584 = vlaneseq
  %v585 = vshrl.u32 %v584, 7
  %v586 = vsub.s32 %v485, %v585
  %v587 = vrot.slane %v299, %v586
  %v588 = vsel %vm490, %v587, %v583
  %v589 = vlaneseq
  %v590 = vshrl.u32 %v589, 7
  %v591 = vsub.s32 %v492, %v590
  %v592 = vrot.slane %v300, %v591
  %v593 = vsel %vm497, %v592, %v588
  %v594 = vlaneseq
  %v595 = vshrl.u32 %v594, 7
  %v596 = vsub.s32 %v499, %v595
  %v597 = vrot.slane %v301, %v596
  %v598 = vsel %vm504, %v597, %v593
  %v599 = vlaneseq
  %v600 = vshrl.u32 %v599, 7
  %v601 = vsub.s32 %v506, %v600
  %v602 = vrot.slane %v302, %v601
  %v603 = vsel %vm511, %v602, %v598
  %v604 = vlaneseq
  %v605 = vshrl.u32 %v604, 7
  %v606 = vsub.s32 %v513, %v605
  %v607 = vrot.slane %v303, %v606
  %v608 = vsel %vm518, %v607, %v603
  %v609 = vlaneseq
  %v610 = vshrl.u32 %v609, 7
  %v611 = vsub.s32 %v520, %v610
  %v612 = vrot.slane %v304, %v611
  %v613 = vsel %vm525, %v612, %v608
  %v614 = vlaneseq
  %v615 = vshrl.u32 %v614, 7
  %v616 = vsub.s32 %v527, %v615
  %v617 = vrot.slane %v305, %v616
  %v618 = vsel %vm532, %v617, %v613
  %v619 = vlaneseq
  %v620 = vshrl.u32 %v619, 7
  %v621 = vsub.s32 %v534, %v620
  %v622 = vrot.slane %v306, %v621
  %v623 = vsel %vm539, %v622, %v618
  %v624 = vlaneseq
  %v625 = vshrl.u32 %v624, 7
  %v626 = vsub.s32 %v541, %v625
  %v627 = vrot.slane %v307, %v626
  %v628 = vsel %vm546, %v627, %v623
  %v629 = vlaneseq
  %v630 = vshrl.u32 %v629, 7
  %v631 = vsub.s32 %v548, %v630
  %v632 = vrot.slane %v308, %v631
  %v633 = vsel %vm553, %v632, %v628
  %v634 = vlaneseq
  %v635 = vshrl.u32 %v634, 7
  %v636 = vsub.s32 %v445, %v635
  %v637 = vrot.slane %v309, %v636
  %v638 = vlaneseq
  %v639 = vshrl.u32 %v638, 7
  %v640 = vsub.s32 %v450, %v639
  %v641 = vrot.slane %v310, %v640
  %v642 = vsel %vm455, %v641, %v637
  %v643 = vlaneseq
  %v644 = vshrl.u32 %v643, 7
  %v645 = vsub.s32 %v457, %v644
  %v646 = vrot.slane %v311, %v645
  %v647 = vsel %vm462, %v646, %v642
  %v648 = vlaneseq
  %v649 = vshrl.u32 %v648, 7
  %v650 = vsub.s32 %v464, %v649
  %v651 = vrot.slane %v312, %v650
  %v652 = vsel %vm469, %v651, %v647
  %v653 = vlaneseq
  %v654 = vshrl.u32 %v653, 7
  %v655 = vsub.s32 %v471, %v654
  %v656 = vrot.slane %v313, %v655
  %v657 = vsel %vm476, %v656, %v652
  %v658 = vlaneseq
  %v659 = vshrl.u32 %v658, 7
  %v660 = vsub.s32 %v478, %v659
  %v661 = vrot.slane %v314, %v660
  %v662 = vsel %vm483, %v661, %v657
  %v663 = vlaneseq
  %v664 = vshrl.u32 %v663, 7
  %v665 = vsub.s32 %v485, %v664
  %v666 = vrot.slane %v315, %v665
  %v667 = vsel %vm490, %v666, %v662
  %v668 = vlaneseq
  %v669 = vshrl.u32 %v668, 7
  %v670 = vsub.s32 %v492, %v669
  %v671 = vrot.slane %v316, %v670
  %v672 = vsel %vm497, %v671, %v667
  %v673 = vlaneseq
  %v674 = vshrl.u32 %v673, 7
  %v675 = vsub.s32 %v499, %v674
  %v676 = vrot.slane %v317, %v675
  %v677 = vsel %vm504, %v676, %v672
  %v678 = vlaneseq
  %v679 = vshrl.u32 %v678, 7
  %v680 = vsub.s32 %v506, %v679
  %v681 = vrot.slane %v318, %v680
  %v682 = vsel %vm511, %v681, %v677
  %v683 = vlaneseq
  %v684 = vshrl.u32 %v683, 7
  %v685 = vsub.s32 %v513, %v684
  %v686 = vrot.slane %v319, %v685
  %v687 = vsel %vm518, %v686, %v682
  %v688 = vlaneseq
  %v689 = vshrl.u32 %v688, 7
  %v690 = vsub.s32 %v520, %v689
  %v691 = vrot.slane %v320, %v690
  %v692 = vsel %vm525, %v691, %v687
  %v693 = vlaneseq
  %v694 = vshrl.u32 %v693, 7
  %v695 = vsub.s32 %v527, %v694
  %v696 = vrot.slane %v321, %v695
  %v697 = vsel %vm532, %v696, %v692
  %v698 = vlaneseq
  %v699 = vshrl.u32 %v698, 7
  %v700 = vsub.s32 %v534, %v699
  %v701 = vrot.slane %v322, %v700
  %v702 = vsel %vm539, %v701, %v697
  %v703 = vlaneseq
  %v704 = vshrl.u32 %v703, 7
  %v705 = vsub.s32 %v541, %v704
  %v706 = vrot.slane %v323, %v705
  %v707 = vsel %vm546, %v706, %v702
  %v708 = vlaneseq
  %v709 = vshrl.u32 %v708, 7
  %v710 = vsub.s32 %v548, %v709
  %v711 = vrot.slane %v324, %v710
  %v712 = vsel %vm553, %v711, %v707
  %v713 = vlaneseq
  %v714 = vshrl.u32 %v713, 7
  %v715 = vsub.s32 %v445, %v714
  %v716 = vrot.slane %v325, %v715
  %v717 = vlaneseq
  %v718 = vshrl.u32 %v717, 7
  %v719 = vsub.s32 %v450, %v718
  %v720 = vrot.slane %v326, %v719
  %v721 = vsel %vm455, %v720, %v716
  %v722 = vlaneseq
  %v723 = vshrl.u32 %v722, 7
  %v724 = vsub.s32 %v457, %v723
  %v725 = vrot.slane %v327, %v724
  %v726 = vsel %vm462, %v725, %v721
  %v727 = vlaneseq
  %v728 = vshrl.u32 %v727, 7
  %v729 = vsub.s32 %v464, %v728
  %v730 = vrot.slane %v328, %v729
  %v731 = vsel %vm469, %v730, %v726
  %v732 = vlaneseq
  %v733 = vshrl.u32 %v732, 7
  %v734 = vsub.s32 %v471, %v733
  %v735 = vrot.slane %v329, %v734
  %v736 = vsel %vm476, %v735, %v731
  %v737 = vlaneseq
  %v738 = vshrl.u32 %v737, 7
  %v739 = vsub.s32 %v478, %v738
  %v740 = vrot.slane %v330, %v739
  %v741 = vsel %vm483, %v740, %v736
  %v742 = vlaneseq
  %v743 = vshrl.u32 %v742, 7
  %v744 = vsub.s32 %v485, %v743
  %v745 = vrot.slane %v331, %v744
  %v746 = vsel %vm490, %v745, %v741
  %v747 = vlaneseq
  %v748 = vshrl.u32 %v747, 7
  %v749 = vsub.s32 %v492, %v748
  %v750 = vrot.slane %v332, %v749
  %v751 = vsel %vm497, %v750, %v746
  %v752 = vlaneseq
  %v753 = vshrl.u32 %v752, 7
  %v754 = vsub.s32 %v499, %v753
  %v755 = vrot.slane %v333, %v754
  %v756 = vsel %vm504, %v755, %v751
  %v757 = vlaneseq
  %v758 = vshrl.u32 %v757, 7
  %v759 = vsub.s32 %v506, %v758
  %v760 = vrot.slane %v334, %v759
  %v761 = vsel %vm511, %v760, %v756
  %v762 = vlaneseq
  %v763 = vshrl.u32 %v762, 7
  %v764 = vsub.s32 %v513, %v763
  %v765 = vrot.slane %v335, %v764
  %v766 = vsel %vm518, %v765, %v761
  %v767 = vlaneseq
  %v768 = vshrl.u32 %v767, 7
  %v769 = vsub.s32 %v520, %v768
  %v770 = vrot.slane %v336, %v769
  %v771 = vsel %vm525, %v770, %v766
  %v772 = vlaneseq
  %v773 = vshrl.u32 %v772, 7
  %v774 = vsub.s32 %v527, %v773
  %v775 = vrot.slane %v337, %v774
  %v776 = vsel %vm532, %v775, %v771
  %v777 = vlaneseq
  %v778 = vshrl.u32 %v777, 7
  %v779 = vsub.s32 %v534, %v778
  %v780 = vrot.slane %v338, %v779
  %v781 = vsel %vm539, %v780, %v776
  %v782 = vlaneseq
  %v783 = vshrl.u32 %v782, 7
  %v784 = vsub.s32 %v541, %v783
  %v785 = vrot.slane %v339, %v784
  %v786 = vsel %vm546, %v785, %v781
  %v787 = vlaneseq
  %v788 = vshrl.u32 %v787, 7
  %v789 = vsub.s32 %v548, %v788
  %v790 = vrot.slane %v340, %v789
  %v791 = vsel %vm553, %v790, %v786
  %vm792 = vcmask 1041409
  %v793 = vsel %vm792, %v712, %v554
  %v794 = vsel %vm792, %v791, %v633
  %797 = vmatprep.subr.mxu0 0.0
  %798 = vmatpush1.msra.mxu0 %v341
  %799 = vmatprep.subr.mxu0 0.0
  %800 = vmatpush1.msra.mxu0 %v342
  %801 = vmatprep.subr.mxu0 0.0
  %802 = vmatpush1.msra.mxu0 %v343
  %803 = vmatprep.subr.mxu0 0.0
  %804 = vmatpush1.msra.mxu0 %v344
  %805 = vmatprep.subr.mxu0 0.0
  %806 = vmatpush1.msra.mxu0 %v345
  %807 = vmatprep.subr.mxu0 0.0
  %808 = vmatpush1.msra.mxu0 %v346
  %809 = vmatprep.subr.mxu0 0.0
  %810 = vmatpush1.msra.mxu0 %v347
  %811 = vmatprep.subr.mxu0 0.0
  %812 = vmatpush1.msra.mxu0 %v348
  %813 = vmatprep.subr.mxu0 0.0
  %814 = vmatpush1.msra.mxu0 %v349
  %815 = vmatprep.subr.mxu0 0.0
  %816 = vmatpush1.msra.mxu0 %v350
  %817 = vmatprep.subr.mxu0 0.0
  %818 = vmatpush1.msra.mxu0 %v351
  %819 = vmatprep.subr.mxu0 0.0
  %820 = vmatpush1.msra.mxu0 %v352
  %821 = vmatprep.subr.mxu0 0.0
  %822 = vmatpush1.msra.mxu0 %v353
  %823 = vmatprep.subr.mxu0 0.0
  %824 = vmatpush1.msra.mxu0 %v354
  %825 = vmatprep.subr.mxu0 0.0
  %826 = vmatpush1.msra.mxu0 %v355
  %827 = vmatprep.subr.mxu0 0.0
  %828 = vmatpush1.msra.mxu0 %v356
  %829 = vmatprep.subr.mxu0 0.0
  %830 = vmatpush1.msra.mxu0 %v357
  %831 = vmatprep.subr.mxu0 0.0
  %832 = vmatpush1.msra.mxu0 %v358
  %833 = vmatprep.subr.mxu0 0.0
  %834 = vmatpush1.msra.mxu0 %v359
  %835 = vmatprep.subr.mxu0 0.0
  %836 = vmatpush1.msra.mxu0 %v360
  %837 = vmatprep.subr.mxu0 0.0
  %838 = vmatpush1.msra.mxu0 %v361
  %839 = vmatprep.subr.mxu0 0.0
  %840 = vmatpush1.msra.mxu0 %v362
  %841 = vmatprep.subr.mxu0 0.0
  %842 = vmatpush1.msra.mxu0 %v363
  %843 = vmatprep.subr.mxu0 0.0
  %844 = vmatpush1.msra.mxu0 %v364
  %845 = vmatprep.subr.mxu0 0.0
  %846 = vmatpush1.msra.mxu0 %v365
  %847 = vmatprep.subr.mxu0 0.0
  %848 = vmatpush1.msra.mxu0 %v366
  %849 = vmatprep.subr.mxu0 0.0
  %850 = vmatpush1.msra.mxu0 %v367
  %851 = vmatprep.subr.mxu0 0.0
  %852 = vmatpush1.msra.mxu0 %v368
  %853 = vmatprep.subr.mxu0 0.0
  %854 = vmatpush1.msra.mxu0 %v369
  %855 = vmatprep.subr.mxu0 0.0
  %856 = vmatpush1.msra.mxu0 %v370
  %857 = vmatprep.subr.mxu0 0.0
  %858 = vmatpush1.msra.mxu0 %v371
  %859 = vmatprep.subr.mxu0 0.0
  %860 = vmatpush1.msra.mxu0 %v372
  %861 = vmatprep.mubr.f32.mxu0 %v794
  %862 = vmatmul.mubr.f32.gmra.mrb[0].mxu0 %v793
  %v863 = vpop.f32.mrb[0].mxu0
  %v864 = vadd.f32 %v378, %v863
  %v865 = vpop.f32.mrb[0].mxu0
  %866 = vdwg.mxu0
  %v867 = vmax.f32 %v864, 0.0
  %v868 = vld [vmem:[%s3] sm:$0xff]
  %v869 = vld [vmem:[%s3 + $0x8] sm:$0xff]
  %v870 = vld [vmem:[%s3 + $0x10] sm:$0xff]
  %v871 = vld [vmem:[%s3 + $0x18] sm:$0xff]
  %v872 = vld [vmem:[%s4] sm:$0x3]
  %v874 = vlaneseq
  %v875 = vshrl.u32 %v874, 7
  %v876 = vsub.s32 0, %v875
  %v877 = vrot.slane %v872, %v876
  %v878 = vlaneseq
  %v879 = vshrl.u32 %v878, 7
  %v880 = vsub.s32 1, %v879
  %v881 = vrot.slane %v872, %v880
  %vm884 = vcmask 130048
  %v886 = vsel %vm884, %v867, 0
  %888 = vmatprep.subr.mxu0 %v869
  %889 = vmatpush1.msra.mxu0 %v868
  %890 = vmatprep.subr.mxu0 %v871
  %891 = vmatpush1.msra.mxu0 %v870
  %892 = vmatprep.subr.mxu0 0.0
  %893 = vmatpush1.msra.mxu0 0.0
  %894 = vmatprep.subr.mxu0 0.0
  %895 = vmatpush1.msra.mxu0 0.0
  %896 = vmatprep.subr.mxu0 0.0
  %897 = vmatpush1.msra.mxu0 0.0
  %898 = vmatprep.subr.mxu0 0.0
  %899 = vmatpush1.msra.mxu0 0.0
  %900 = vmatprep.subr.mxu0 0.0
  %901 = vmatpush1.msra.mxu0 0.0
  %902 = vmatprep.subr.mxu0 0.0
  %903 = vmatpush1.msra.mxu0 0.0
  %904 = vmatprep.subr.mxu0 0.0
  %905 = vmatpush1.msra.mxu0 0.0
  %906 = vmatprep.subr.mxu0 0.0
  %907 = vmatpush1.msra.mxu0 0.0
  %908 = vmatprep.subr.mxu0 0.0
  %909 = vmatpush1.msra.mxu0 0.0
  %910 = vmatprep.subr.mxu0 0.0
  %911 = vmatpush1.msra.mxu0 0.0
  %912 = vmatprep.subr.mxu0 0.0
  %913 = vmatpush1.msra.mxu0 0.0
  %914 = vmatprep.subr.mxu0 0.0
  %915 = vmatpush1.msra.mxu0 0.0
  %916 = vmatprep.subr.mxu0 0.0
  %917 = vmatpush1.msra.mxu0 0.0
  %918 = vmatprep.subr.mxu0 0.0
  %919 = vmatpush1.msra.mxu0 0.0
  %920 = vmatprep.subr.mxu0 0.0
  %921 = vmatpush1.msra.mxu0 0.0
  %922 = vmatprep.subr.mxu0 0.0
  %923 = vmatpush1.msra.mxu0 0.0
  %924 = vmatprep.subr.mxu0 0.0
  %925 = vmatpush1.msra.mxu0 0.0
  %926 = vmatprep.subr.mxu0 0.0
  %927 = vmatpush1.msra.mxu0 0.0
  %928 = vmatprep.subr.mxu0 0.0
  %929 = vmatpush1.msra.mxu0 0.0
  %930 = vmatprep.subr.mxu0 0.0
  %931 = vmatpush1.msra.mxu0 0.0
  %932 = vmatprep.subr.mxu0 0.0
  %933 = vmatpush1.msra.mxu0 0.0
  %934 = vmatprep.subr.mxu0 0.0
  %935 = vmatpush1.msra.mxu0 0.0
  %936 = vmatprep.subr.mxu0 0.0
  %937 = vmatpush1.msra.mxu0 0.0
  %938 = vmatprep.subr.mxu0 0.0
  %939 = vmatpush1.msra.mxu0 0.0
  %940 = vmatprep.subr.mxu0 0.0
  %941 = vmatpush1.msra.mxu0 0.0
  %942 = vmatprep.subr.mxu0 0.0
  %943 = vmatpush1.msra.mxu0 0.0
  %944 = vmatprep.subr.mxu0 0.0
  %945 = vmatpush1.msra.mxu0 0.0
  %946 = vmatprep.subr.mxu0 0.0
  %947 = vmatpush1.msra.mxu0 0.0
  %948 = vmatprep.subr.mxu0 0.0
  %949 = vmatpush1.msra.mxu0 0.0
  %950 = vmatprep.subr.mxu0 0.0
  %951 = vmatpush1.msra.mxu0 0.0
  %952 = vmatprep.mubr.f32.mxu0 0.0
  %953 = vmatmul.mubr.f32.gmra.mrb[0].mxu0 %v886
  %v954 = vpop.f32.mrb[0].mxu0
  %v955 = vadd.f32 %v877, %v954
  %v956 = vpop.f32.mrb[0].mxu0
  %v957 = vadd.f32 %v881, %v956
  %958 = vdwg.mxu0
  %v959 = vxor.u32 %v955, 2147483648
  %v960 = vxor.u32 %v957, 2147483648
  %v961 = vmul.f32 %v959, 1.442695
  %v962 = vpow.pop %v961
  %v963 = vmul.f32 %v960, 1.442695
  %v964 = vpow.pop %v963
  %v965 = vadd.f32 %v962, 1.0
  %v966 = vadd.f32 %v964, 1.0
  %v967 = vrcp.pop %v965
  %v968 = vmul.f32 1.0, %v967
  %v969 = vrcp.pop %v966
  %v970 = vmul.f32 1.0, %v969
  %v971 = vlaneseq
  %v972 = vshrl.u32 %v971, 7
  %v973 = vsub.s32 0, %v972
  %v974 = vrot.slane %v968, %v973
  %976 = vbcast.lane.b32.xlu0 %v974, 256
  %v977 = vpop.permute.xlu0 %976
  %s979 = sor.u32 256, 8
  %980 = vbcast.lane.b32.xlu0 %v974, %s979
  %v981 = vpop.permute.xlu0 %980
  %s983 = sor.u32 256, 16
  %984 = vbcast.lane.b32.xlu0 %v974, %s983
  %v985 = vpop.permute.xlu0 %984
  %s987 = sor.u32 256, 24
  %988 = vbcast.lane.b32.xlu0 %v974, %s987
  %v989 = vpop.permute.xlu0 %988
  %s991 = sor.u32 256, 32
  %992 = vbcast.lane.b32.xlu0 %v974, %s991
  %v993 = vpop.permute.xlu0 %992
  %s995 = sor.u32 256, 40
  %996 = vbcast.lane.b32.xlu0 %v974, %s995
  %v997 = vpop.permute.xlu0 %996
  %s999 = sor.u32 256, 48
  %1000 = vbcast.lane.b32.xlu0 %v974, %s999
  %v1001 = vpop.permute.xlu0 %1000
  %s1003 = sor.u32 256, 56
  %1004 = vbcast.lane.b32.xlu0 %v974, %s1003
  %v1005 = vpop.permute.xlu0 %1004
  %s1007 = sor.u32 256, 64
  %1008 = vbcast.lane.b32.xlu0 %v974, %s1007
  %v1009 = vpop.permute.xlu0 %1008
  %s1011 = sor.u32 256, 72
  %1012 = vbcast.lane.b32.xlu0 %v974, %s1011
  %v1013 = vpop.permute.xlu0 %1012
  %s1015 = sor.u32 256, 80
  %1016 = vbcast.lane.b32.xlu0 %v974, %s1015
  %v1017 = vpop.permute.xlu0 %1016
  %s1019 = sor.u32 256, 88
  %1020 = vbcast.lane.b32.xlu0 %v974, %s1019
  %v1021 = vpop.permute.xlu0 %1020
  %s1023 = sor.u32 256, 96
  %1024 = vbcast.lane.b32.xlu0 %v974, %s1023
  %v1025 = vpop.permute.xlu0 %1024
  %s1027 = sor.u32 256, 104
  %1028 = vbcast.lane.b32.xlu0 %v974, %s1027
  %v1029 = vpop.permute.xlu0 %1028
  %s1031 = sor.u32 256, 112
  %1032 = vbcast.lane.b32.xlu0 %v974, %s1031
  %v1033 = vpop.permute.xlu0 %1032
  %s1035 = sor.u32 256, 120
  %1036 = vbcast.lane.b32.xlu0 %v974, %s1035
  %v1037 = vpop.permute.xlu0 %1036
  %v1038 = vlaneseq
  %v1039 = vshrl.u32 %v1038, 7
  %v1040 = vsub.s32 0, %v1039
  %v1041 = vrot.slane %v970, %v1040
  %1043 = vbcast.lane.b32.xlu0 %v1041, 256
  %v1044 = vpop.permute.xlu0 %1043
  %s1046 = sor.u32 256, 8
  %1047 = vbcast.lane.b32.xlu0 %v1041, %s1046
  %v1048 = vpop.permute.xlu0 %1047
  %s1050 = sor.u32 256, 16
  %1051 = vbcast.lane.b32.xlu0 %v1041, %s1050
  %v1052 = vpop.permute.xlu0 %1051
  %s1054 = sor.u32 256, 24
  %1055 = vbcast.lane.b32.xlu0 %v1041, %s1054
  %v1056 = vpop.permute.xlu0 %1055
  %s1058 = sor.u32 256, 32
  %1059 = vbcast.lane.b32.xlu0 %v1041, %s1058
  %v1060 = vpop.permute.xlu0 %1059
  %s1062 = sor.u32 256, 40
  %1063 = vbcast.lane.b32.xlu0 %v1041, %s1062
  %v1064 = vpop.permute.xlu0 %1063
  %s1066 = sor.u32 256, 48
  %1067 = vbcast.lane.b32.xlu0 %v1041, %s1066
  %v1068 = vpop.permute.xlu0 %1067
  %s1070 = sor.u32 256, 56
  %1071 = vbcast.lane.b32.xlu0 %v1041, %s1070
  %v1072 = vpop.permute.xlu0 %1071
  %s1074 = sor.u32 256, 64
  %1075 = vbcast.lane.b32.xlu0 %v1041, %s1074
  %v1076 = vpop.permute.xlu0 %1075
  %s1078 = sor.u32 256, 72
  %1079 = vbcast.lane.b32.xlu0 %v1041, %s1078
  %v1080 = vpop.permute.xlu0 %1079
  %s1082 = sor.u32 256, 80
  %1083 = vbcast.lane.b32.xlu0 %v1041, %s1082
  %v1084 = vpop.permute.xlu0 %1083
  %s1086 = sor.u32 256, 88
  %1087 = vbcast.lane.b32.xlu0 %v1041, %s1086
  %v1088 = vpop.permute.xlu0 %1087
  %s1090 = sor.u32 256, 96
  %1091 = vbcast.lane.b32.xlu0 %v1041, %s1090
  %v1092 = vpop.permute.xlu0 %1091
  %s1094 = sor.u32 256, 104
  %1095 = vbcast.lane.b32.xlu0 %v1041, %s1094
  %v1096 = vpop.permute.xlu0 %1095
  %s1098 = sor.u32 256, 112
  %1099 = vbcast.lane.b32.xlu0 %v1041, %s1098
  %v1100 = vpop.permute.xlu0 %1099
  %s1102 = sor.u32 256, 120
  %1103 = vbcast.lane.b32.xlu0 %v1041, %s1102
  %v1104 = vpop.permute.xlu0 %1103
  %v1105 = vlaneseq
  %v1106 = vshrl.u32 %v1105, 7
  %v1107 = vsub.s32 1, %v1106
  %v1108 = vrot.slane %v968, %v1107
  %1110 = vbcast.lane.b32.xlu0 %v1108, 256
  %v1111 = vpop.permute.xlu0 %1110
  %s1113 = sor.u32 256, 8
  %1114 = vbcast.lane.b32.xlu0 %v1108, %s1113
  %v1115 = vpop.permute.xlu0 %1114
  %s1117 = sor.u32 256, 16
  %1118 = vbcast.lane.b32.xlu0 %v1108, %s1117
  %v1119 = vpop.permute.xlu0 %1118
  %s1121 = sor.u32 256, 24
  %1122 = vbcast.lane.b32.xlu0 %v1108, %s1121
  %v1123 = vpop.permute.xlu0 %1122
  %s1125 = sor.u32 256, 32
  %1126 = vbcast.lane.b32.xlu0 %v1108, %s1125
  %v1127 = vpop.permute.xlu0 %1126
  %s1129 = sor.u32 256, 40
  %1130 = vbcast.lane.b32.xlu0 %v1108, %s1129
  %v1131 = vpop.permute.xlu0 %1130
  %s1133 = sor.u32 256, 48
  %1134 = vbcast.lane.b32.xlu0 %v1108, %s1133
  %v1135 = vpop.permute.xlu0 %1134
  %s1137 = sor.u32 256, 56
  %1138 = vbcast.lane.b32.xlu0 %v1108, %s1137
  %v1139 = vpop.permute.xlu0 %1138
  %s1141 = sor.u32 256, 64
  %1142 = vbcast.lane.b32.xlu0 %v1108, %s1141
  %v1143 = vpop.permute.xlu0 %1142
  %s1145 = sor.u32 256, 72
  %1146 = vbcast.lane.b32.xlu0 %v1108, %s1145
  %v1147 = vpop.permute.xlu0 %1146
  %s1149 = sor.u32 256, 80
  %1150 = vbcast.lane.b32.xlu0 %v1108, %s1149
  %v1151 = vpop.permute.xlu0 %1150
  %s1153 = sor.u32 256, 88
  %1154 = vbcast.lane.b32.xlu0 %v1108, %s1153
  %v1155 = vpop.permute.xlu0 %1154
  %s1157 = sor.u32 256, 96
  %1158 = vbcast.lane.b32.xlu0 %v1108, %s1157
  %v1159 = vpop.permute.xlu0 %1158
  %s1161 = sor.u32 256, 104
  %1162 = vbcast.lane.b32.xlu0 %v1108, %s1161
  %v1163 = vpop.permute.xlu0 %1162
  %s1165 = sor.u32 256, 112
  %1166 = vbcast.lane.b32.xlu0 %v1108, %s1165
  %v1167 = vpop.permute.xlu0 %1166
  %s1169 = sor.u32 256, 120
  %1170 = vbcast.lane.b32.xlu0 %v1108, %s1169
  %v1171 = vpop.permute.xlu0 %1170
  %v1172 = vlaneseq
  %v1173 = vshrl.u32 %v1172, 7
  %v1174 = vsub.s32 1, %v1173
  %v1175 = vrot.slane %v970, %v1174
  %1177 = vbcast.lane.b32.xlu0 %v1175, 256
  %v1178 = vpop.permute.xlu0 %1177
  %s1180 = sor.u32 256, 8
  %1181 = vbcast.lane.b32.xlu0 %v1175, %s1180
  %v1182 = vpop.permute.xlu0 %1181
  %s1184 = sor.u32 256, 16
  %1185 = vbcast.lane.b32.xlu0 %v1175, %s1184
  %v1186 = vpop.permute.xlu0 %1185
  %s1188 = sor.u32 256, 24
  %1189 = vbcast.lane.b32.xlu0 %v1175, %s1188
  %v1190 = vpop.permute.xlu0 %1189
  %s1192 = sor.u32 256, 32
  %1193 = vbcast.lane.b32.xlu0 %v1175, %s1192
  %v1194 = vpop.permute.xlu0 %1193
  %s1196 = sor.u32 256, 40
  %1197 = vbcast.lane.b32.xlu0 %v1175, %s1196
  %v1198 = vpop.permute.xlu0 %1197
  %s1200 = sor.u32 256, 48
  %1201 = vbcast.lane.b32.xlu0 %v1175, %s1200
  %v1202 = vpop.permute.xlu0 %1201
  %s1204 = sor.u32 256, 56
  %1205 = vbcast.lane.b32.xlu0 %v1175, %s1204
  %v1206 = vpop.permute.xlu0 %1205
  %s1208 = sor.u32 256, 64
  %1209 = vbcast.lane.b32.xlu0 %v1175, %s1208
  %v1210 = vpop.permute.xlu0 %1209
  %s1212 = sor.u32 256, 72
  %1213 = vbcast.lane.b32.xlu0 %v1175, %s1212
  %v1214 = vpop.permute.xlu0 %1213
  %s1216 = sor.u32 256, 80
  %1217 = vbcast.lane.b32.xlu0 %v1175, %s1216
  %v1218 = vpop.permute.xlu0 %1217
  %s1220 = sor.u32 256, 88
  %1221 = vbcast.lane.b32.xlu0 %v1175, %s1220
  %v1222 = vpop.permute.xlu0 %1221
  %s1224 = sor.u32 256, 96
  %1225 = vbcast.lane.b32.xlu0 %v1175, %s1224
  %v1226 = vpop.permute.xlu0 %1225
  %s1228 = sor.u32 256, 104
  %1229 = vbcast.lane.b32.xlu0 %v1175, %s1228
  %v1230 = vpop.permute.xlu0 %1229
  %s1232 = sor.u32 256, 112
  %1233 = vbcast.lane.b32.xlu0 %v1175, %s1232
  %v1234 = vpop.permute.xlu0 %1233
  %s1236 = sor.u32 256, 120
  %1237 = vbcast.lane.b32.xlu0 %v1175, %s1236
  %v1238 = vpop.permute.xlu0 %1237
  %v1239 = vmul.f32 %v20, %v977
  %v1240 = vmul.f32 %v21, %v981
  %v1241 = vmul.f32 %v22, %v985
  %v1242 = vmul.f32 %v23, %v989
  %v1243 = vmul.f32 %v24, %v993
  %v1244 = vmul.f32 %v25, %v997
  %v1245 = vmul.f32 %v26, %v1001
  %v1246 = vmul.f32 %v27, %v1005
  %v1247 = vmul.f32 %v28, %v1009
  %v1248 = vmul.f32 %v29, %v1013
  %v1249 = vmul.f32 %v30, %v1017
  %v1250 = vmul.f32 %v31, %v1021
  %v1251 = vmul.f32 %v32, %v1025
  %v1252 = vmul.f32 %v33, %v1029
  %v1253 = vmul.f32 %v34, %v1033
  %v1254 = vmul.f32 %v35, %v1037
  %v1255 = vmul.f32 %v36, %v1044
  %v1256 = vmul.f32 %v37, %v1048
  %v1257 = vmul.f32 %v38, %v1052
  %v1258 = vmul.f32 %v39, %v1056
  %v1259 = vmul.f32 %v40, %v1060
  %v1260 = vmul.f32 %v41, %v1064
  %v1261 = vmul.f32 %v42, %v1068
  %v1262 = vmul.f32 %v43, %v1072
  %v1263 = vmul.f32 %v44, %v1076
  %v1264 = vmul.f32 %v45, %v1080
  %v1265 = vmul.f32 %v46, %v1084
  %v1266 = vmul.f32 %v47, %v1088
  %v1267 = vmul.f32 %v48, %v1092
  %v1268 = vmul.f32 %v49, %v1096
  %v1269 = vmul.f32 %v50, %v1100
  %v1270 = vmul.f32 %v51, %v1104
  %v1271 = vmul.f32 %v52, %v1111
  %v1272 = vmul.f32 %v53, %v1115
  %v1273 = vmul.f32 %v54, %v1119
  %v1274 = vmul.f32 %v55, %v1123
  %v1275 = vmul.f32 %v56, %v1127
  %v1276 = vmul.f32 %v57, %v1131
  %v1277 = vmul.f32 %v58, %v1135
  %v1278 = vmul.f32 %v59, %v1139
  %v1279 = vmul.f32 %v60, %v1143
  %v1280 = vmul.f32 %v61, %v1147
  %v1281 = vmul.f32 %v62, %v1151
  %v1282 = vmul.f32 %v63, %v1155
  %v1283 = vmul.f32 %v64, %v1159
  %v1284 = vmul.f32 %v65, %v1163
  %v1285 = vmul.f32 %v66, %v1167
  %v1286 = vmul.f32 %v67, %v1171
  %v1287 = vmul.f32 %v68, %v1178
  %v1288 = vmul.f32 %v69, %v1182
  %v1289 = vmul.f32 %v70, %v1186
  %v1290 = vmul.f32 %v71, %v1190
  %v1291 = vmul.f32 %v72, %v1194
  %v1292 = vmul.f32 %v73, %v1198
  %v1293 = vmul.f32 %v74, %v1202
  %v1294 = vmul.f32 %v75, %v1206
  %v1295 = vmul.f32 %v76, %v1210
  %v1296 = vmul.f32 %v77, %v1214
  %v1297 = vmul.f32 %v78, %v1218
  %v1298 = vmul.f32 %v79, %v1222
  %v1299 = vmul.f32 %v80, %v1226
  %v1300 = vmul.f32 %v81, %v1230
  %v1301 = vmul.f32 %v82, %v1234
  %v1302 = vmul.f32 %v83, %v1238
  %1303 = vst.msk [vmem:[%s5] sm:$0xff] %vm84, %v1239
  %1304 = vst.msk [vmem:[%s5 + $0x8] sm:$0xff] %vm84, %v1240
  %1305 = vst.msk [vmem:[%s5 + $0x10] sm:$0xff] %vm84, %v1241
  %1306 = vst.msk [vmem:[%s5 + $0x18] sm:$0xff] %vm84, %v1242
  %1307 = vst.msk [vmem:[%s5 + $0x20] sm:$0xff] %vm84, %v1243
  %1308 = vst.msk [vmem:[%s5 + $0x28] sm:$0xff] %vm84, %v1244
  %1309 = vst.msk [vmem:[%s5 + $0x30] sm:$0xff] %vm84, %v1245
  %1310 = vst.msk [vmem:[%s5 + $0x38] sm:$0xff] %vm84, %v1246
  %1311 = vst.msk [vmem:[%s5 + $0x40] sm:$0xff] %vm84, %v1247
  %1312 = vst.msk [vmem:[%s5 + $0x48] sm:$0xff] %vm84, %v1248
  %1313 = vst.msk [vmem:[%s5 + $0x50] sm:$0xff] %vm84, %v1249
  %1314 = vst.msk [vmem:[%s5 + $0x58] sm:$0xff] %vm84, %v1250
  %1315 = vst.msk [vmem:[%s5 + $0x60] sm:$0xff] %vm84, %v1251
  %1316 = vst.msk [vmem:[%s5 + $0x68] sm:$0xff] %vm84, %v1252
  %1317 = vst.msk [vmem:[%s5 + $0x70] sm:$0xff] %vm84, %v1253
  %1318 = vst.msk [vmem:[%s5 + $0x78] sm:$0xff] %vm84, %v1254
  %1319 = vst.msk [vmem:[%s5 + $0x80] sm:$0xff] %vm84, %v1255
  %1320 = vst.msk [vmem:[%s5 + $0x88] sm:$0xff] %vm84, %v1256
  %1321 = vst.msk [vmem:[%s5 + $0x90] sm:$0xff] %vm84, %v1257
  %1322 = vst.msk [vmem:[%s5 + $0x98] sm:$0xff] %vm84, %v1258
  %1323 = vst.msk [vmem:[%s5 + $0xa0] sm:$0xff] %vm84, %v1259
  %1324 = vst.msk [vmem:[%s5 + $0xa8] sm:$0xff] %vm84, %v1260
  %1325 = vst.msk [vmem:[%s5 + $0xb0] sm:$0xff] %vm84, %v1261
  %1326 = vst.msk [vmem:[%s5 + $0xb8] sm:$0xff] %vm84, %v1262
  %1327 = vst.msk [vmem:[%s5 + $0xc0] sm:$0xff] %vm84, %v1263
  %1328 = vst.msk [vmem:[%s5 + $0xc8] sm:$0xff] %vm84, %v1264
  %1329 = vst.msk [vmem:[%s5 + $0xd0] sm:$0xff] %vm84, %v1265
  %1330 = vst.msk [vmem:[%s5 + $0xd8] sm:$0xff] %vm84, %v1266
  %1331 = vst.msk [vmem:[%s5 + $0xe0] sm:$0xff] %vm84, %v1267
  %1332 = vst.msk [vmem:[%s5 + $0xe8] sm:$0xff] %vm84, %v1268
  %1333 = vst.msk [vmem:[%s5 + $0xf0] sm:$0xff] %vm84, %v1269
  %1334 = vst.msk [vmem:[%s5 + $0xf8] sm:$0xff] %vm84, %v1270
  %1335 = vst.msk [vmem:[%s5 + $0x100] sm:$0xff] %vm84, %v1271
  %1336 = vst.msk [vmem:[%s5 + $0x108] sm:$0xff] %vm84, %v1272
  %1337 = vst.msk [vmem:[%s5 + $0x110] sm:$0xff] %vm84, %v1273
  %1338 = vst.msk [vmem:[%s5 + $0x118] sm:$0xff] %vm84, %v1274
  %1339 = vst.msk [vmem:[%s5 + $0x120] sm:$0xff] %vm84, %v1275
  %1340 = vst.msk [vmem:[%s5 + $0x128] sm:$0xff] %vm84, %v1276
  %1341 = vst.msk [vmem:[%s5 + $0x130] sm:$0xff] %vm84, %v1277
  %1342 = vst.msk [vmem:[%s5 + $0x138] sm:$0xff] %vm84, %v1278
  %1343 = vst.msk [vmem:[%s5 + $0x140] sm:$0xff] %vm84, %v1279
  %1344 = vst.msk [vmem:[%s5 + $0x148] sm:$0xff] %vm84, %v1280
  %1345 = vst.msk [vmem:[%s5 + $0x150] sm:$0xff] %vm84, %v1281
  %1346 = vst.msk [vmem:[%s5 + $0x158] sm:$0xff] %vm84, %v1282
  %1347 = vst.msk [vmem:[%s5 + $0x160] sm:$0xff] %vm84, %v1283
  %1348 = vst.msk [vmem:[%s5 + $0x168] sm:$0xff] %vm84, %v1284
  %1349 = vst.msk [vmem:[%s5 + $0x170] sm:$0xff] %vm84, %v1285
  %1350 = vst.msk [vmem:[%s5 + $0x178] sm:$0xff] %vm84, %v1286
  %1351 = vst.msk [vmem:[%s5 + $0x180] sm:$0xff] %vm84, %v1287
  %1352 = vst.msk [vmem:[%s5 + $0x188] sm:$0xff] %vm84, %v1288
  %1353 = vst.msk [vmem:[%s5 + $0x190] sm:$0xff] %vm84, %v1289
  %1354 = vst.msk [vmem:[%s5 + $0x198] sm:$0xff] %vm84, %v1290
  %1355 = vst.msk [vmem:[%s5 + $0x1a0] sm:$0xff] %vm84, %v1291
  %1356 = vst.msk [vmem:[%s5 + $0x1a8] sm:$0xff] %vm84, %v1292
  %1357 = vst.msk [vmem:[%s5 + $0x1b0] sm:$0xff] %vm84, %v1293
  %1358 = vst.msk [vmem:[%s5 + $0x1b8] sm:$0xff] %vm84, %v1294
  %1359 = vst.msk [vmem:[%s5 + $0x1c0] sm:$0xff] %vm84, %v1295
  %1360 = vst.msk [vmem:[%s5 + $0x1c8] sm:$0xff] %vm84, %v1296
  %1361 = vst.msk [vmem:[%s5 + $0x1d0] sm:$0xff] %vm84, %v1297
  %1362 = vst.msk [vmem:[%s5 + $0x1d8] sm:$0xff] %vm84, %v1298
  %1363 = vst.msk [vmem:[%s5 + $0x1e0] sm:$0xff] %vm84, %v1299
  %1364 = vst.msk [vmem:[%s5 + $0x1e8] sm:$0xff] %vm84, %v1300
  %1365 = vst.msk [vmem:[%s5 + $0x1f0] sm:$0xff] %vm84, %v1301
  %1366 = vst.msk [vmem:[%s5 + $0x1f8] sm:$0xff] %vm84, %v1302
  // Predicated region
  $region22: #{tpu_custom_call.1} parent=0 // pred_check
    _
  $region23: #{tpu_custom_call.1} parent=0 // pred_check_branch
    %1368 = sbr.rel (0) target = $region25
  $region24: #{tpu_custom_call.1} parent=0 // pred_region
    _
  $region25: #{tpu_custom_call.1} parent=0 // pred_fallthru
    _
  // Predicated region
  $region26: #{tpu_custom_call.1} parent=0 // pred_check
    _
  $region27: #{tpu_custom_call.1} parent=0 // pred_check_branch
    %1370 = sbr.rel (0) target = $region29
  $region28: #{tpu_custom_call.1} parent=0 // pred_region
    _
  $region29: #{tpu_custom_call.1} parent=0 // pred_fallthru
    _

</llo_original>
